<compile_context>
chip_gen: v5e
topology: v5e:2x2
jax: 0.10.0
libtpu: 0.0.40
codegen_flags: <defaults>
</compile_context>

<pallas_src>
import math
import functools

import jax
import jax.numpy as jnp
from jax.experimental import pallas as pl
from jax.experimental.pallas import tpu as pltpu


def _round_up(x, m):
    return pl.cdiv(x, m) * m


# ----------------------------------------------------------------------------- 
# Kernels
# -----------------------------------------------------------------------------
def _emb_lookup_kernel(ids_ref, table_ref, out_ref):
    """Single resident vocab slab: one MXU pass per token tile, direct store.

    ids_ref:   (T, 1)     int32
    table_ref: (Vp, D)    f32/bf16, sqrt(d_model) pre-folded, fetched once
    out_ref:   (T, D)     out dtype
    """
    ids = ids_ref[...]                                                  # (T, 1)
    t = ids.shape[0]
    vp = table_ref.shape[0]
    iota = jax.lax.broadcasted_iota(jnp.int32, (t, vp), 1)              # (T, Vp)
    onehot = (ids == iota).astype(table_ref.dtype)                      # exact in bf16
    out_ref[...] = jnp.dot(
        onehot, table_ref[...], preferred_element_type=jnp.float32
    ).astype(out_ref.dtype)


def _emb_lookup_kernel_vslabs(ids_ref, table_ref, out_ref, *, tile_v):
    """Vocab-slab streaming fallback: accumulate directly into the resident out tile.

    Grid: (token tiles [parallel], vocab slabs [arbitrary]).
    """
    v = pl.program_id(1)

    @pl.when(v == 0)
    def _():
        out_ref[...] = jnp.zeros_like(out_ref)

    # Subtract the slab base from the (T,1) ids (cheap) instead of adding it to the
    # (T, Vt) iota (a full VPU pass).
    ids = ids_ref[...] - v * tile_v                                     # (T, 1)
    t = ids.shape[0]
    iota = jax.lax.broadcasted_iota(jnp.int32, (t, tile_v), 1)          # (T, Vt)
    onehot = (ids == iota).astype(table_ref.dtype)
    contrib = jnp.dot(onehot, table_ref[...], preferred_element_type=jnp.float32)
    # Exactly one slab contributes a non-zero row per token -> exact accumulation.
    out_ref[...] += contrib.astype(out_ref.dtype)


# -----------------------------------------------------------------------------
# Host-side wrappers
# -----------------------------------------------------------------------------
def prepare_embedding_table(table, *, table_dtype=jnp.float32, tile_vocab=None):
    """One-time table prep (do NOT call per forward pass).

    Pre-folds the sqrt(d_model) scale (in f32, so bf16 casting stays as accurate as
    possible), pads the vocab axis and casts to `table_dtype`.

    table_dtype=jnp.bfloat16 halves resident table bytes and runs the MXU at bf16
    rate; it is an explicit opt-in because it rounds the weights (~0.4% rel).
    If tile_vocab is given, the table is padded to a multiple of it (use a multiple
    of 128; 256+ preferred on v6e/v7x).
    """
    V, D = table.shape
    scale = math.sqrt(D)
    tbl = table.astype(jnp.float32) * scale
    if tile_vocab is None:
        v_pad = _round_up(V, 128)          # lane-aligned single resident slab
    else:
        v_pad = _round_up(V, tile_vocab)
    padded = jnp.zeros((v_pad, D), jnp.float32).at[:V].set(tbl)
    return padded.astype(table_dtype)


def sequence_embedding(x, padded_table, *, tile_tokens=2048, tile_vocab=None,
                       out_dtype=jnp.float32):
    """SequenceEmbedding.forward: emb(x) * sqrt(d_model).

    x:            (B, S) integer token ids
    padded_table: (V_pad, D) table from prepare_embedding_table (scale pre-folded)
    returns       (B, S, D) in out_dtype
    """
    B, S = x.shape
    v_pad, D = padded_table.shape
    N = B * S

    # --- vocab tiling: single resident slab unless the caller streams slabs ------
    if tile_vocab is None or tile_vocab >= v_pad:
        tile_v = v_pad
    else:
        assert v_pad % tile_vocab == 0, "prepare the table with the same tile_vocab"
        tile_v = tile_vocab
    n_v = v_pad // tile_v

    # --- token tiling -------------------------------------------------------------
    if N >= 512 and _round_up(N, 8) <= tile_tokens:
        # Keep >= 2 grid steps on the parallel axis so the v7x megacore split helps.
        tile_t = _round_up(pl.cdiv(N, 2), 8)
    else:
        tile_t = min(tile_tokens, _round_up(N, 8))

    # Keep the double-buffered working set comfortably under the scoped-VMEM default
    # on every generation (raise vmem_limit_bytes via CompilerParams to go bigger).
    out_bytes = jnp.dtype(out_dtype).itemsize
    tbl_bytes = jnp.dtype(padded_table.dtype).itemsize
    budget = 12 * 2**20
    while tile_t > 256:
        need = 2 * tile_t * (4 + D * out_bytes) + 2 * tile_v * D * tbl_bytes
        if need <= budget:
            break
        tile_t = _round_up(tile_t // 2, 8)

    n_pad = _round_up(N, tile_t)
    ids = x.reshape(N).astype(jnp.int32)
    if n_pad != N:
        # For production shapes pick tile_tokens dividing B*S so this pad and the
        # final [:N] slice are no-ops.
        ids = jnp.pad(ids, (0, n_pad - N))
    ids_2d = ids.reshape(n_pad, 1)
    n_t = n_pad // tile_t

    if n_v == 1:
        out_flat = pl.pallas_call(
            _emb_lookup_kernel,
            out_shape=jax.ShapeDtypeStruct((n_pad, D), out_dtype),
            grid_spec=pltpu.PrefetchScalarGridSpec(
                num_scalar_prefetch=0,
                grid=(n_t,),
                in_specs=[
                    pl.BlockSpec((tile_t, 1), lambda i: (i, 0)),     # token-id tile
                    pl.BlockSpec((v_pad, D), lambda i: (0, 0)),      # resident table
                ],
                out_specs=pl.BlockSpec((tile_t, D), lambda i: (i, 0)),
            ),
            compiler_params=pltpu.CompilerParams(
                dimension_semantics=("parallel",)),
        )(ids_2d, padded_table)
    else:
        # Multi-slab fallback for large vocabularies.  (On v5e, pipeline_mode=
        # pl.Buffered(3) on the table spec can hide the remaining slab DMA.)
        kernel = functools.partial(_emb_lookup_kernel_vslabs, tile_v=tile_v)
        out_flat = pl.pallas_call(
            kernel,
            out_shape=jax.ShapeDtypeStruct((n_pad, D), out_dtype),
            grid_spec=pltpu.PrefetchScalarGridSpec(
                num_scalar_prefetch=0,
                grid=(n_t, n_v),
                in_specs=[
                    pl.BlockSpec((tile_t, 1), lambda i, v: (i, 0)),
                    pl.BlockSpec((tile_v, D), lambda i, v: (v, 0)),
                ],
                out_specs=pl.BlockSpec((tile_t, D), lambda i, v: (i, 0)),
            ),
            compiler_params=pltpu.CompilerParams(
                dimension_semantics=("parallel", "arbitrary")),
        )(ids_2d, padded_table)

    out = out_flat if n_pad == N else out_flat[:N]
    return out.reshape(B, S, D)


# -----------------------------------------------------------------------------
# Demo / correctness check
# -----------------------------------------------------------------------------
if __name__ == "__main__":
    # MusicTransformer defaults: d_model=64.  sqrt(64)=8 is a power of two, and we
    # round the generated weights to bf16-representable values (still stored f32) so
    # every kernel path (f32 table, bf16 table, bf16 output) can be checked tightly
    # against the pure-JAX reference, independent of MXU f32-pass decomposition.
    batch, seq = 2, 8
    n_tokens, d_model = 100, 64

    key = jax.random.PRNGKey(0)
    k_emb, k_ids, k_ids2 = jax.random.split(key, 3)

    emb_table = jax.random.normal(k_emb, (n_tokens, d_model), dtype=jnp.float32)
    emb_table = emb_table.astype(jnp.bfloat16).astype(jnp.float32)
    token_ids = jax.random.randint(k_ids, (batch, seq), 0, n_tokens, dtype=jnp.int32)

    scale = math.sqrt(d_model)
    ref = jnp.take(emb_table, token_ids, axis=0) * scale          # (B, S, D) f32

    # --- path 1: exact f32 table, single resident slab, 1-D grid -----------------
    tbl_f32 = prepare_embedding_table(emb_table, table_dtype=jnp.float32)
    out_f32 = jax.block_until_ready(sequence_embedding(token_ids, tbl_f32))
    assert out_f32.shape == (batch, seq, d_model)
    assert out_f32.dtype == jnp.float32
    assert jnp.allclose(out_f32, ref, atol=1e-5, rtol=1e-5)

    # --- path 2: bf16 table + bf16 output, single resident slab ------------------
    tbl_bf16 = prepare_embedding_table(emb_table, table_dtype=jnp.bfloat16)
    out_bf16 = jax.block_until_ready(
        sequence_embedding(token_ids, tbl_bf16, out_dtype=jnp.bfloat16))
    assert out_bf16.dtype == jnp.bfloat16
    assert jnp.allclose(out_bf16.astype(jnp.float32), ref, atol=1e-5, rtol=1e-5)

    # --- path 3: multi token tiles + vocab-slab streaming (2-D grid) -------------
    batch2, seq2, n_tokens2 = 4, 96, 200
    k_emb2, _ = jax.random.split(k_ids2)
    emb_table2 = jax.random.normal(k_emb2, (n_tokens2, d_model), dtype=jnp.float32)
    emb_table2 = emb_table2.astype(jnp.bfloat16).astype(jnp.float32)
    token_ids2 = jax.random.randint(k_ids2, (batch2, seq2), 0, n_tokens2,
                                    dtype=jnp.int32)
    ref2 = jnp.take(emb_table2, token_ids2, axis=0) * scale

    tbl2 = prepare_embedding_table(emb_table2, table_dtype=jnp.bfloat16,
                                   tile_vocab=128)
    out2 = jax.block_until_ready(
        sequence_embedding(token_ids2, tbl2, tile_tokens=128, tile_vocab=128))
    assert out2.shape == (batch2, seq2, d_model)
    assert jnp.allclose(out2, ref2, atol=1e-5, rtol=1e-5)

    print("KERNEL_OK")
</pallas_src>

<mosaic_0001>
module attributes {stable_mosaic.version = 11 : i64} {
  func.func @_emb_lookup_kernel(%arg0: i32, %arg1: memref<16x1xi32, #tpu.memory_space<vmem>>, %arg2: memref<128x64xf32, #tpu.memory_space<vmem>>, %arg3: memref<16x64xf32, #tpu.memory_space<vmem>>) attributes {dimension_semantics = [#tpu.dimension_semantics<parallel>], iteration_bounds = array<i64: 1>, scalar_prefetch = 0 : i64, scratch_operands = 0 : i64, tpu.core_type = #tpu.core_type<tc>, window_params = [{transform_indices = @transform_0, window_bounds = array<i64: 16, 1>}, {pipeline_mode = #tpu.pipeline_mode<synchronous>, transform_indices = @transform_1, window_bounds = array<i64: 128, 64>}, {transform_indices = @transform_2, window_bounds = array<i64: 16, 64>}]} {
    %c0 = arith.constant 0 : index
    %c0_0 = arith.constant 0 : index
    %0 = vector.load %arg1[%c0, %c0_0] : memref<16x1xi32, #tpu.memory_space<vmem>>, vector<16x1xi32>
    %1 = tpu.iota {dimensions = array<i32: 1>} : vector<16x128xi32>
    %2 = vector.broadcast %0 : vector<16x1xi32> to vector<16x128xi32>
    %3 = arith.cmpi eq, %2, %1 : vector<16x128xi32>
    %4 = arith.extui %3 : vector<16x128xi1> to vector<16x128xi32>
    %5 = arith.sitofp %4 : vector<16x128xi32> to vector<16x128xf32>
    %c0_1 = arith.constant 0 : index
    %c0_2 = arith.constant 0 : index
    %6 = vector.load %arg2[%c0_1, %c0_2] : memref<128x64xf32, #tpu.memory_space<vmem>>, vector<128x64xf32>
    %cst = arith.constant dense<0.000000e+00> : vector<16x64xf32>
    %7 = tpu.matmul %5, %6, %cst {dimension_numbers = #tpu.dot_dimension_numbers<[1], [0], [0], [1], [0, 0, 1, 1], [], []>} : vector<16x128xf32>, vector<128x64xf32>, vector<16x64xf32> -> vector<16x64xf32>
    %c0_3 = arith.constant 0 : index
    %c0_4 = arith.constant 0 : index
    %8 = vector.load %arg3[%c0_3, %c0_4] : memref<16x64xf32, #tpu.memory_space<vmem>>, vector<16x64xf32>
    tpu.vector_store %arg3[%c0_3, %c0_4], %7 {strides = array<i32>} : memref<16x64xf32, #tpu.memory_space<vmem>>, vector<16x64xf32>,
    return
  }
  func.func @transform_0(%arg0: i32) -> (i32, i32) {
    %c0_i32 = arith.constant 0 : i32
    %c0_i32_0 = arith.constant 0 : i32
    return %arg0, %c0_i32 : i32, i32
  }
  func.func @transform_1(%arg0: i32) -> (i32, i32) {
    %c0_i32 = arith.constant 0 : i32
    %c0_i32_0 = arith.constant 0 : i32
    %c0_i32_1 = arith.constant 0 : i32
    return %c0_i32, %c0_i32_0 : i32, i32
  }
  func.func @transform_2(%arg0: i32) -> (i32, i32) {
    %c0_i32 = arith.constant 0 : i32
    %c0_i32_0 = arith.constant 0 : i32
    return %arg0, %c0_i32 : i32, i32
  }
}

</mosaic_0001>

<llo_original>
// kernel: tpu_custom_call.1
$region0: #{tpu_custom_call.1}
  #allocation0 [shape = 'u32[]', space=smem, size = 0x4, offset = 0x4, fixed_abs, tag = 'smem constant byte address 0x4 - core index']
  #allocation1 [shape = 'u32[72,128]{1,0:T(1,128)}', space=vmem, size = 0x9000, scoped, tag = 'internal scratch']
  %s0 = inlined_call_operand.vmem [shape: s32[16,1], index: 0, kind: input, shape index: {}]
  %s1 = inlined_call_operand.vmem [shape: f32[128,64], index: 1, kind: input, shape index: {}]
  %s2 = inlined_call_operand.hbm [shape: f32[16,64], index: 2, kind: output, shape index: {}]
  %s3 = sld [smem:[#allocation0]]
  $region18: #{tpu_custom_call.1} parent=0
    _
  %s5 = ssub.s32 1, %s3
  %s6 = scalar_select 0, %s5, %s3
  $region1: #{tpu_custom_call.1} parent=0
    #allocation2 [shape = 'u8[8192]{0}', space=vmem, size = 0x2000, scoped, tag = 'output window, operand 0, single buffered']
    #allocation3 [shape = 's32[1]{0}', space=sflag, size = 0x4, scoped, tag = 'scoped memory for tpu_custom_call.1']
    %7 = vsyncpa [#allocation3], 0
    // Predicated region
    $region2: #{tpu_custom_call.1} parent=1 // pred_check
      _
    $region3: #{tpu_custom_call.1} parent=1 // pred_check_branch
      %9 = sbr.rel (0) target = $region5
    $region4: #{tpu_custom_call.1} parent=1 // pred_region
      _
    $region5: #{tpu_custom_call.1} parent=1 // pred_fallthru
      _
    // Predicated region
    $region6: #{tpu_custom_call.1} parent=1 // pred_check
      _
    $region7: #{tpu_custom_call.1} parent=1 // pred_check_branch
      %11 = sbr.rel (0) target = $region9
    $region8: #{tpu_custom_call.1} parent=1 // pred_region
      _
    $region9: #{tpu_custom_call.1} parent=1 // pred_fallthru
      _
    %v12 = vld [vmem:[%s0] sm:$0xff]
    %v13 = vld [vmem:[%s0 + $0x8] sm:$0xff]
    %v14 = vlaneseq
    %v15 = vand.u32 %v14, 127
    %16 = vset.pattern.permute.xlu0 0
    %17 = vperm.xlu0 %16, %v12
    %v18 = vpop.permute.xlu0 %17
    %19 = vset.pattern.permute.xlu0 0
    %20 = vperm.xlu0 %19, %v13
    %v21 = vpop.permute.xlu0 %20
    %vm22 = vcmp.eq.s32.totalorder %v18, %v15
    %vm23 = vcmp.eq.s32.totalorder %v21, %v15
    %v24 = vsel %vm22, 1, 0
    %v25 = vsel %vm23, 1, 0
    %v26 = vcvt.s32.f32 %v24
    %v27 = vcvt.s32.f32 %v25
    %v28 = vld [vmem:[%s1] sm:$0xff]
    %v29 = vld [vmem:[%s1 + $0x8] sm:$0xff]
    %v30 = vld [vmem:[%s1 + $0x10] sm:$0xff]
    %v31 = vld [vmem:[%s1 + $0x18] sm:$0xff]
    %v32 = vld [vmem:[%s1 + $0x20] sm:$0xff]
    %v33 = vld [vmem:[%s1 + $0x28] sm:$0xff]
    %v34 = vld [vmem:[%s1 + $0x30] sm:$0xff]
    %v35 = vld [vmem:[%s1 + $0x38] sm:$0xff]
    %v36 = vld [vmem:[%s1 + $0x40] sm:$0xff]
    %v37 = vld [vmem:[%s1 + $0x48] sm:$0xff]
    %v38 = vld [vmem:[%s1 + $0x50] sm:$0xff]
    %v39 = vld [vmem:[%s1 + $0x58] sm:$0xff]
    %v40 = vld [vmem:[%s1 + $0x60] sm:$0xff]
    %v41 = vld [vmem:[%s1 + $0x68] sm:$0xff]
    %v42 = vld [vmem:[%s1 + $0x70] sm:$0xff]
    %v43 = vld [vmem:[%s1 + $0x78] sm:$0xff]
    %44 = vmatpush.msra.mxu0 %v43
    %45 = vmatpush.msra.mxu0 %v42
    %46 = vmatpush.msra.mxu0 %v41
    %47 = vmatpush.msra.mxu0 %v40
    %48 = vmatpush.msra.mxu0 %v39
    %49 = vmatpush.msra.mxu0 %v38
    %50 = vmatpush.msra.mxu0 %v37
    %51 = vmatpush.msra.mxu0 %v36
    %52 = vmatpush.msra.mxu0 %v35
    %53 = vmatpush.msra.mxu0 %v34
    %54 = vmatpush.msra.mxu0 %v33
    %55 = vmatpush.msra.mxu0 %v32
    %56 = vmatpush.msra.mxu0 %v31
    %57 = vmatpush.msra.mxu0 %v30
    %58 = vmatpush.msra.mxu0 %v29
    %59 = vmatpush.msra.mxu0 %v28
    %60 = vmatmul.f32.gmra.mxu0 %v26
    %v61 = vpop.f32.mrf.mxu0
    %v62 = vadd.f32 0.0, %v61
    %63 = vmatmul.f32.gmra.mxu0 %v27
    %v64 = vpop.f32.mrf.mxu0
    %v65 = vadd.f32 0.0, %v64
    %66 = vdwg.mxu0
    %vm67 = vcmask 523264
    %68 = vst.msk [vmem:[#allocation2] sm:$0xff] %vm67, %v62
    %69 = vst.msk [vmem:[#allocation2 + $0x8] sm:$0xff] %vm67, %v65
    // Predicated region
    $region10: #{tpu_custom_call.1} parent=1 // pred_check
      _
    $region11: #{tpu_custom_call.1} parent=1 // pred_check_branch
      %71 = sbr.rel (0) target = $region13
    $region12: #{tpu_custom_call.1} parent=1 // pred_region
      %73 = vsyncadd [#allocation3], 0
      %s74 = sshll.u32 [#allocation2], 4
      %s75 = int_to_ptr.vmem [resolvable:$true] %s74
      %s76 = sshll.u32 %s2, 4
      %s77 = int_to_ptr.hbm [resolvable:$true] %s76
      %82 = dma.vmem_to_hbm [thread:$0]  %s75, 256, %s77, [#allocation3], 128, 128, 8
    $region13: #{tpu_custom_call.1} parent=1 // pred_fallthru
      _
    // Predicated region
    $region14: #{tpu_custom_call.1} parent=1 // pred_check
      _
    $region15: #{tpu_custom_call.1} parent=1 // pred_check_branch
      %84 = sbr.rel (0) target = $region17
    $region16: #{tpu_custom_call.1} parent=1 // pred_region
      %86 = dma.done [#allocation3], 256
    $region17: #{tpu_custom_call.1} parent=1 // pred_fallthru
      _
    %87 = vsyncpa [#allocation3], 1

</llo_original>
